<compile_context>
chip_gen: v7x
topology: tpu7x:2x2x1
jax: 0.10.0
libtpu: 0.0.40
codegen_flags: <defaults>
</compile_context>

<pallas_src>
import math

import jax
import jax.numpy as jnp
from jax.experimental import pallas as pl
from jax.experimental.pallas import tpu as pltpu


def _round_up(x, m):
    return ((x + m - 1) // m) * m


# --------------------------------------------------------------------------------
# Kernel: tiled matmul + bias, accumulating directly into the resident output block
# --------------------------------------------------------------------------------
def _matmul_bias_kernel(x_ref, wt_ref, b_ref, o_ref):
    """o[i,j] += x[i,k] @ wt[k,j]; bias added on the last k step.

    x_ref  : (TM, TK)  compute dtype
    wt_ref : (TK, TN)  compute dtype  (weight already transposed to (in, out))
    b_ref  : (1,  TN)  f32
    o_ref  : (TM, TN)  f32  -- BlockSpec ignores k, so this tile stays VMEM-resident
                               across the K loop and doubles as the f32 accumulator.
    """
    k = pl.program_id(2)

    @pl.when(k == 0)
    def _():
        o_ref[...] = jnp.zeros_like(o_ref)

    o_ref[...] += jnp.dot(x_ref[...], wt_ref[...],
                          preferred_element_type=jnp.float32)

    @pl.when(k == pl.num_programs(2) - 1)
    def _():
        o_ref[...] += b_ref[...]


# --------------------------------------------------------------------------------
# Bridgeout weight perturbation (hoisted out of the kernel, done once per forward)
# --------------------------------------------------------------------------------
def _perturbed_weight(weight, key, *, nu, p, batch_size):
    """W' = W + sqrt(||W_row||_2 * nu/batch_size) * noise, noise in {-1, 1/(1-p)-1}."""
    reg = float(nu) / float(batch_size)
    keep = 1.0 - float(p)
    w32 = weight.astype(jnp.float32)
    row_norm = jnp.sqrt(jnp.sum(w32 * w32, axis=1, keepdims=True))        # (out, 1)
    wq = jnp.sqrt(row_norm * reg)                                         # (out, 1)
    bern = jax.random.bernoulli(key, keep, shape=weight.shape).astype(jnp.float32)
    noise = bern / keep - 1.0                                             # {-1, +1} for p=0.5
    return w32 + wq * noise


# --------------------------------------------------------------------------------
# Wrapper
# --------------------------------------------------------------------------------
def group_bridgeout_fc_forward(x, weight, bias, *, nu=0.5, p=0.5, training=True,
                               rng_key=None, compute_dtype=jnp.bfloat16,
                               tm=512, tn=1024, tk=512,
                               vmem_limit_bytes=48 * 1024 * 1024):
    """x: (bppt, batch, in_features). weight: (out, in). Returns (bppt, batch, out), f32.

    Note: for repeated calls with a fixed weight, the transpose/pad/cast of the weight
    can be hoisted by the caller; here it is one fused XLA pass per forward.
    """
    bppt, batch_size, in_features = x.shape
    out_features = weight.shape[0]
    rows = bppt * batch_size

    if bias is None:
        bias_f32 = jnp.zeros((out_features,), jnp.float32)
    else:
        bias_f32 = bias.astype(jnp.float32)

    # Effective weight for this forward pass (perturbed once when training).
    if training and nu > 0.0:
        if rng_key is None:
            rng_key = jax.random.PRNGKey(0)
        w_eff = _perturbed_weight(weight, rng_key, nu=nu, p=p, batch_size=batch_size)
    else:
        w_eff = weight.astype(jnp.float32)

    # ---- tile selection -----------------------------------------------------
    TM = tm if rows > tm else _round_up(rows, 8)
    TN = tn if out_features > tn else _round_up(out_features, 128)
    TK = tk if in_features > tk else _round_up(in_features, 128)

    # v7x has 2 TensorCores: if both "parallel" grid axes collapse to one tile but
    # there is enough row work, split the row axis so each core gets a shard.
    if rows >= 512 and pl.cdiv(rows, TM) == 1 and pl.cdiv(out_features, TN) == 1:
        TM = _round_up(pl.cdiv(rows, 2), 8)

    R_pad = _round_up(rows, TM)
    N_pad = _round_up(out_features, TN)
    K_pad = _round_up(in_features, TK)

    # ---- layout / padding / casts (single fused XLA pass per array) ---------
    x2d = x.reshape(rows, in_features).astype(compute_dtype)
    wt = w_eff.T.astype(compute_dtype)                      # (in, out): MXU-native layout
    b2d = bias_f32.reshape(1, out_features)

    if R_pad != rows or K_pad != in_features:
        x2d = jnp.pad(x2d, ((0, R_pad - rows), (0, K_pad - in_features)))
    if K_pad != in_features or N_pad != out_features:
        wt = jnp.pad(wt, ((0, K_pad - in_features), (0, N_pad - out_features)))
    if N_pad != out_features:
        b2d = jnp.pad(b2d, ((0, 0), (0, N_pad - out_features)))

    grid = (R_pad // TM, N_pad // TN, K_pad // TK)

    cparams = pltpu.CompilerParams(
        dimension_semantics=("parallel", "parallel", "arbitrary"),
        vmem_limit_bytes=vmem_limit_bytes)

    out2d = pl.pallas_call(
        _matmul_bias_kernel,
        out_shape=jax.ShapeDtypeStruct((R_pad, N_pad), jnp.float32),
        grid_spec=pltpu.PrefetchScalarGridSpec(
            num_scalar_prefetch=0,
            grid=grid,
            in_specs=[
                pl.BlockSpec((TM, TK), lambda i, j, k: (i, k)),
                pl.BlockSpec((TK, TN), lambda i, j, k: (k, j)),
                pl.BlockSpec((1, TN), lambda i, j, k: (0, j)),
            ],
            out_specs=pl.BlockSpec((TM, TN), lambda i, j, k: (i, j)),
        ),
        compiler_params=cparams,
    )(x2d, wt, b2d)

    out2d = out2d[:rows, :out_features]
    return out2d.reshape(bppt, batch_size, out_features)


def init_params(key, in_features, out_features):
    """kaiming_uniform_(a=sqrt(5)) + bias uniform(+-1/sqrt(fan_in)), like reset_parameters()."""
    kw, kb = jax.random.split(key)
    bound = 1.0 / math.sqrt(in_features)
    weight = jax.random.uniform(kw, (out_features, in_features), jnp.float32,
                                minval=-bound, maxval=bound)
    bias = jax.random.uniform(kb, (out_features,), jnp.float32,
                              minval=-bound, maxval=bound)
    return weight, bias


if __name__ == "__main__":
    key = jax.random.PRNGKey(0)
    k_param, k_x, k_noise = jax.random.split(key, 3)

    # Small, deliberately non-(8,128)-aligned shapes to exercise the padding path.
    bppt, batch, in_features, out_features = 3, 5, 96, 160
    weight, bias = init_params(k_param, in_features, out_features)
    x = jax.random.normal(k_x, (bppt, batch, in_features), jnp.float32)

    # ---- eval path (plain linear), f32 compute: tight reference check -------
    out_eval = group_bridgeout_fc_forward(x, weight, bias, nu=0.5, training=False,
                                          compute_dtype=jnp.float32)
    out_eval = jax.block_until_ready(out_eval)
    ref_eval = jnp.einsum("tbi,oi->tbo", x, weight) + bias
    assert out_eval.shape == (bppt, batch, out_features)
    assert jnp.allclose(out_eval, ref_eval, atol=1e-3, rtol=1e-3)

    # ---- training path (bridgeout perturbation), f32 compute ----------------
    out_train = group_bridgeout_fc_forward(x, weight, bias, nu=0.5, p=0.5,
                                           training=True, rng_key=k_noise,
                                           compute_dtype=jnp.float32)
    out_train = jax.block_until_ready(out_train)
    out_train2 = group_bridgeout_fc_forward(x, weight, bias, nu=0.5, p=0.5,
                                            training=True, rng_key=k_noise,
                                            compute_dtype=jnp.float32)
    out_train2 = jax.block_until_ready(out_train2)
    assert jnp.allclose(out_train, out_train2)          # deterministic per key

    # Reference uses the identical perturbed weight (same key / batch_size).
    w_prime = _perturbed_weight(weight, k_noise, nu=0.5, p=0.5, batch_size=batch)
    ref_train = jnp.einsum("tbi,oi->tbo", x, w_prime) + bias
    assert jnp.allclose(out_train, ref_train, atol=1e-3, rtol=1e-3)

    # Perturbation magnitude equals wq per output row; p=0.5 noise is sign-balanced.
    reg = 0.5 / batch
    wq_ref = jnp.sqrt(jnp.linalg.norm(weight, axis=1, keepdims=True) * reg)
    delta = w_prime - weight
    assert jnp.allclose(jnp.abs(delta), jnp.broadcast_to(wq_ref, delta.shape),
                        atol=1e-5, rtol=1e-4)
    frac_pos = float(jnp.mean((delta > 0).astype(jnp.float32)))
    assert 0.4 < frac_pos < 0.6

    # ---- bf16 MXU fast path (default compute dtype): loose check ------------
    out_bf16 = group_bridgeout_fc_forward(x, weight, bias, nu=0.5, training=False)
    out_bf16 = jax.block_until_ready(out_bf16)
    assert jnp.allclose(out_bf16, ref_eval, atol=0.1, rtol=0.05)

    print("KERNEL_OK")
</pallas_src>

<mosaic_0001>
module attributes {stable_mosaic.version = 11 : i64} {
  func.func @_matmul_bias_kernel(%arg0: i32, %arg1: i32, %arg2: i32, %arg3: memref<16x128xf32, #tpu.memory_space<vmem>>, %arg4: memref<128x256xf32, #tpu.memory_space<vmem>>, %arg5: memref<1x256xf32, #tpu.memory_space<vmem>>, %arg6: memref<16x256xf32, #tpu.memory_space<vmem>>) attributes {dimension_semantics = [#tpu.dimension_semantics<parallel>, #tpu.dimension_semantics<parallel>, #tpu.dimension_semantics<arbitrary>], iteration_bounds = array<i64: 1, 1, 1>, scalar_prefetch = 0 : i64, scratch_operands = 0 : i64, tpu.core_type = #tpu.core_type<tc>, window_params = [{transform_indices = @transform_0, window_bounds = array<i64: 16, 128>}, {transform_indices = @transform_1, window_bounds = array<i64: 128, 256>}, {transform_indices = @transform_2, window_bounds = array<i64: 1, 256>}, {transform_indices = @transform_3, window_bounds = array<i64: 16, 256>}]} {
    %c0_i32 = arith.constant 0 : i32
    %0 = arith.cmpi eq, %arg2, %c0_i32 : i32
    %1 = arith.extui %0 : i1 to i32
    %c0_i32_0 = arith.constant 0 : i32
    %2 = arith.cmpi ne, %1, %c0_i32_0 : i32
    scf.if %2 {
      %cst_10 = arith.constant 0.000000e+00 : f32
      %12 = vector.broadcast %cst_10 : f32 to vector<16x256xf32>
      %c0_11 = arith.constant 0 : index
      %c0_12 = arith.constant 0 : index
      %13 = vector.load %arg6[%c0_11, %c0_12] : memref<16x256xf32, #tpu.memory_space<vmem>>, vector<16x256xf32>
      tpu.vector_store %arg6[%c0_11, %c0_12], %12 {strides = array<i32>} : memref<16x256xf32, #tpu.memory_space<vmem>>, vector<16x256xf32>,
    } else {
    }
    %c0 = arith.constant 0 : index
    %c0_1 = arith.constant 0 : index
    %3 = vector.load %arg6[%c0, %c0_1] : memref<16x256xf32, #tpu.memory_space<vmem>>, vector<16x256xf32>
    %c0_2 = arith.constant 0 : index
    %c0_3 = arith.constant 0 : index
    %4 = vector.load %arg3[%c0_2, %c0_3] : memref<16x128xf32, #tpu.memory_space<vmem>>, vector<16x128xf32>
    %c0_4 = arith.constant 0 : index
    %c0_5 = arith.constant 0 : index
    %5 = vector.load %arg4[%c0_4, %c0_5] : memref<128x256xf32, #tpu.memory_space<vmem>>, vector<128x256xf32>
    %cst = arith.constant dense<0.000000e+00> : vector<16x256xf32>
    %6 = tpu.matmul %4, %5, %cst {dimension_numbers = #tpu.dot_dimension_numbers<[1], [0], [0], [1], [0, 0, 1, 1], [], []>} : vector<16x128xf32>, vector<128x256xf32>, vector<16x256xf32> -> vector<16x256xf32>
    %7 = arith.addf %3, %6 : vector<16x256xf32>
    %c0_6 = arith.constant 0 : index
    %c0_7 = arith.constant 0 : index
    %8 = vector.load %arg6[%c0_6, %c0_7] : memref<16x256xf32, #tpu.memory_space<vmem>>, vector<16x256xf32>
    tpu.vector_store %arg6[%c0_6, %c0_7], %7 {strides = array<i32>} : memref<16x256xf32, #tpu.memory_space<vmem>>, vector<16x256xf32>,
    %c0_i32_8 = arith.constant 0 : i32
    %9 = arith.cmpi eq, %arg2, %c0_i32_8 : i32
    %10 = arith.extui %9 : i1 to i32
    %c0_i32_9 = arith.constant 0 : i32
    %11 = arith.cmpi ne, %10, %c0_i32_9 : i32
    scf.if %11 {
      %c0_10 = arith.constant 0 : index
      %c0_11 = arith.constant 0 : index
      %12 = vector.load %arg6[%c0_10, %c0_11] : memref<16x256xf32, #tpu.memory_space<vmem>>, vector<16x256xf32>
      %c0_12 = arith.constant 0 : index
      %c0_13 = arith.constant 0 : index
      %13 = vector.load %arg5[%c0_12, %c0_13] : memref<1x256xf32, #tpu.memory_space<vmem>>, vector<1x256xf32>
      %14 = vector.broadcast %13 : vector<1x256xf32> to vector<16x256xf32>
      %15 = arith.addf %12, %14 : vector<16x256xf32>
      %c0_14 = arith.constant 0 : index
      %c0_15 = arith.constant 0 : index
      %16 = vector.load %arg6[%c0_14, %c0_15] : memref<16x256xf32, #tpu.memory_space<vmem>>, vector<16x256xf32>
      tpu.vector_store %arg6[%c0_14, %c0_15], %15 {strides = array<i32>} : memref<16x256xf32, #tpu.memory_space<vmem>>, vector<16x256xf32>,
    } else {
    }
    return
  }
  func.func @transform_0(%arg0: i32, %arg1: i32, %arg2: i32) -> (i32, i32) {
    %c0_i32 = arith.constant 0 : i32
    return %arg0, %arg2 : i32, i32
  }
  func.func @transform_1(%arg0: i32, %arg1: i32, %arg2: i32) -> (i32, i32) {
    %c0_i32 = arith.constant 0 : i32
    return %arg2, %arg1 : i32, i32
  }
  func.func @transform_2(%arg0: i32, %arg1: i32, %arg2: i32) -> (i32, i32) {
    %c0_i32 = arith.constant 0 : i32
    %c0_i32_0 = arith.constant 0 : i32
    return %c0_i32, %arg1 : i32, i32
  }
  func.func @transform_3(%arg0: i32, %arg1: i32, %arg2: i32) -> (i32, i32) {
    %c0_i32 = arith.constant 0 : i32
    return %arg0, %arg1 : i32, i32
  }
}

</mosaic_0001>

<llo_original>
// kernel: tpu_custom_call.1
$region0: #{tpu_custom_call.1}
  #allocation0 [shape = 'u32[]', space=smem, size = 0x4, offset = 0x4, fixed_abs, tag = 'smem constant byte address 0x4 - core index']
  #allocation1 [shape = 'u32[144,128]{1,0:T(1,128)}', space=vmem, size = 0x12000, scoped, tag = 'internal scratch']
  %s0 = inlined_call_operand.hbm [shape: f32[16,128], index: 0, kind: input, shape index: {}]
  %s1 = inlined_call_operand.hbm [shape: f32[128,256], index: 1, kind: input, shape index: {}]
  %s2 = inlined_call_operand.vmem [shape: f32[1,256], index: 2, kind: input, shape index: {}]
  %s3 = inlined_call_operand.hbm [shape: f32[16,256], index: 3, kind: output, shape index: {}]
  %s4 = sld [smem:[#allocation0]]
  $region38: #{tpu_custom_call.1} parent=0
    _
  %s6 = ssub.s32 1, %s4
  %s7 = scalar_select 0, %s6, %s4
  $region1: #{tpu_custom_call.1} parent=0
    #allocation2 [shape = 'u8[8192]{0}', space=vmem, size = 0x2000, scoped, tag = 'input window, operand 0, single buffered']
    #allocation3 [shape = 's32[1]{0}', space=sflag, size = 0x4, scoped, tag = 'scoped memory for tpu_custom_call.1']
    #allocation4 [shape = 's32[1]{0}', space=sflag, size = 0x4, scoped, tag = 'scoped memory for tpu_custom_call.1']
    #allocation5 [shape = 'u8[131072]{0}', space=vmem, size = 0x20000, scoped, tag = 'input window, operand 1, single buffered']
    #allocation6 [shape = 's32[1]{0}', space=sflag, size = 0x4, scoped, tag = 'scoped memory for tpu_custom_call.1']
    #allocation7 [shape = 'u8[16384]{0}', space=vmem, size = 0x4000, scoped, tag = 'output window, operand 0, single buffered']
    %8 = vsyncpa [#allocation3], 0
    %9 = vsyncpa [#allocation6], 0
    %10 = vsyncpa [#allocation4], 0
    // Predicated region
    $region2: #{tpu_custom_call.1} parent=1 // pred_check
      _
    $region3: #{tpu_custom_call.1} parent=1 // pred_check_branch
      %12 = sbr.rel (0) target = $region5
    $region4: #{tpu_custom_call.1} parent=1 // pred_region
      %s14 = ssub.s32 256, 256
      %15 = vsyncadd [#allocation3], %s14
      %s16 = sshll.u32 [#allocation2], 4
      %s17 = int_to_ptr.vmem [resolvable:$true] %s16
      %22 = dma.hbm_to_vmem [thread:$0]  %s0, 256, %s17, [#allocation3], 128, 128, 8
    $region5: #{tpu_custom_call.1} parent=1 // pred_fallthru
      _
    // Predicated region
    $region6: #{tpu_custom_call.1} parent=1 // pred_check
      _
    $region7: #{tpu_custom_call.1} parent=1 // pred_check_branch
      %24 = sbr.rel (0) target = $region9
    $region8: #{tpu_custom_call.1} parent=1 // pred_region
      %s26 = ssub.s32 4096, 4096
      %27 = vsyncadd [#allocation6], %s26
      %s28 = sshll.u32 [#allocation5], 4
      %s29 = int_to_ptr.vmem [resolvable:$true] %s28
      %34 = dma.hbm_to_vmem [thread:$0]  %s1, 4096, %s29, [#allocation6], 256, 256, 16
    $region9: #{tpu_custom_call.1} parent=1 // pred_fallthru
      _
    // Predicated region
    $region10: #{tpu_custom_call.1} parent=1 // pred_check
      _
    $region11: #{tpu_custom_call.1} parent=1 // pred_check_branch
      %36 = sbr.rel (0) target = $region13
    $region12: #{tpu_custom_call.1} parent=1 // pred_region
      _
    $region13: #{tpu_custom_call.1} parent=1 // pred_fallthru
      _
    // Predicated region
    $region14: #{tpu_custom_call.1} parent=1 // pred_check
      _
    $region15: #{tpu_custom_call.1} parent=1 // pred_check_branch
      %38 = sbr.rel (0) target = $region17
    $region16: #{tpu_custom_call.1} parent=1 // pred_region
      %39 = dma.done [#allocation3], 256
    $region17: #{tpu_custom_call.1} parent=1 // pred_fallthru
      _
    // Predicated region
    $region18: #{tpu_custom_call.1} parent=1 // pred_check
      _
    $region19: #{tpu_custom_call.1} parent=1 // pred_check_branch
      %41 = sbr.rel (0) target = $region21
    $region20: #{tpu_custom_call.1} parent=1 // pred_region
      %42 = dma.done [#allocation6], 4096
    $region21: #{tpu_custom_call.1} parent=1 // pred_fallthru
      _
    %p43 = scmp.eq.s32.totalorder 0, 0
    // Predicated region
    $region22: #{tpu_custom_call.1} parent=1 // pred_check
      %p44 = pneg %p43
    $region23: #{tpu_custom_call.1} parent=1 // pred_check_branch
      %46 = sbr.rel (%p44) target = $region25
    $region24: #{tpu_custom_call.1} parent=1 // pred_region
      %47 = vst [vmem:[#allocation7] sm:$0xff] 0.0
      %48 = vst [vmem:[#allocation7 + $0x8] sm:$0xff] 0.0
      %49 = vst [vmem:[#allocation7 + $0x10] sm:$0xff] 0.0
      %50 = vst [vmem:[#allocation7 + $0x18] sm:$0xff] 0.0
    $region25: #{tpu_custom_call.1} parent=1 // pred_fallthru
      _
    %v51 = vld [vmem:[#allocation7] sm:$0xff]
    %v52 = vld [vmem:[#allocation7 + $0x8] sm:$0xff]
    %v53 = vld [vmem:[#allocation7 + $0x10] sm:$0xff]
    %v54 = vld [vmem:[#allocation7 + $0x18] sm:$0xff]
    %v55 = vld [vmem:[#allocation2] sm:$0xff]
    %v56 = vld [vmem:[#allocation2 + $0x8] sm:$0xff]
    %v57 = vld [vmem:[#allocation5] sm:$0xff]
    %v58 = vld [vmem:[#allocation5 + $0x8] sm:$0xff]
    %v59 = vld [vmem:[#allocation5 + $0x10] sm:$0xff]
    %v60 = vld [vmem:[#allocation5 + $0x18] sm:$0xff]
    %v61 = vld [vmem:[#allocation5 + $0x20] sm:$0xff]
    %v62 = vld [vmem:[#allocation5 + $0x28] sm:$0xff]
    %v63 = vld [vmem:[#allocation5 + $0x30] sm:$0xff]
    %v64 = vld [vmem:[#allocation5 + $0x38] sm:$0xff]
    %v65 = vld [vmem:[#allocation5 + $0x40] sm:$0xff]
    %v66 = vld [vmem:[#allocation5 + $0x48] sm:$0xff]
    %v67 = vld [vmem:[#allocation5 + $0x50] sm:$0xff]
    %v68 = vld [vmem:[#allocation5 + $0x58] sm:$0xff]
    %v69 = vld [vmem:[#allocation5 + $0x60] sm:$0xff]
    %v70 = vld [vmem:[#allocation5 + $0x68] sm:$0xff]
    %v71 = vld [vmem:[#allocation5 + $0x70] sm:$0xff]
    %v72 = vld [vmem:[#allocation5 + $0x78] sm:$0xff]
    %v73 = vld [vmem:[#allocation5 + $0x80] sm:$0xff]
    %v74 = vld [vmem:[#allocation5 + $0x88] sm:$0xff]
    %v75 = vld [vmem:[#allocation5 + $0x90] sm:$0xff]
    %v76 = vld [vmem:[#allocation5 + $0x98] sm:$0xff]
    %v77 = vld [vmem:[#allocation5 + $0xa0] sm:$0xff]
    %v78 = vld [vmem:[#allocation5 + $0xa8] sm:$0xff]
    %v79 = vld [vmem:[#allocation5 + $0xb0] sm:$0xff]
    %v80 = vld [vmem:[#allocation5 + $0xb8] sm:$0xff]
    %v81 = vld [vmem:[#allocation5 + $0xc0] sm:$0xff]
    %v82 = vld [vmem:[#allocation5 + $0xc8] sm:$0xff]
    %v83 = vld [vmem:[#allocation5 + $0xd0] sm:$0xff]
    %v84 = vld [vmem:[#allocation5 + $0xd8] sm:$0xff]
    %v85 = vld [vmem:[#allocation5 + $0xe0] sm:$0xff]
    %v86 = vld [vmem:[#allocation5 + $0xe8] sm:$0xff]
    %v87 = vld [vmem:[#allocation5 + $0xf0] sm:$0xff]
    %v88 = vld [vmem:[#allocation5 + $0xf8] sm:$0xff]
    %89 = vmatprep.subr.mxu0 %v58
    %90 = vmatpush1.msra.mxu0 %v57
    %91 = vmatprep.subr.mxu0 %v60
    %92 = vmatpush1.msra.mxu0 %v59
    %93 = vmatprep.subr.mxu0 %v62
    %94 = vmatpush1.msra.mxu0 %v61
    %95 = vmatprep.subr.mxu0 %v64
    %96 = vmatpush1.msra.mxu0 %v63
    %97 = vmatprep.subr.mxu0 %v66
    %98 = vmatpush1.msra.mxu0 %v65
    %99 = vmatprep.subr.mxu0 %v68
    %100 = vmatpush1.msra.mxu0 %v67
    %101 = vmatprep.subr.mxu0 %v70
    %102 = vmatpush1.msra.mxu0 %v69
    %103 = vmatprep.subr.mxu0 %v72
    %104 = vmatpush1.msra.mxu0 %v71
    %105 = vmatprep.subr.mxu0 %v74
    %106 = vmatpush1.msra.mxu0 %v73
    %107 = vmatprep.subr.mxu0 %v76
    %108 = vmatpush1.msra.mxu0 %v75
    %109 = vmatprep.subr.mxu0 %v78
    %110 = vmatpush1.msra.mxu0 %v77
    %111 = vmatprep.subr.mxu0 %v80
    %112 = vmatpush1.msra.mxu0 %v79
    %113 = vmatprep.subr.mxu0 %v82
    %114 = vmatpush1.msra.mxu0 %v81
    %115 = vmatprep.subr.mxu0 %v84
    %116 = vmatpush1.msra.mxu0 %v83
    %117 = vmatprep.subr.mxu0 %v86
    %118 = vmatpush1.msra.mxu0 %v85
    %119 = vmatprep.subr.mxu0 %v88
    %120 = vmatpush1.msra.mxu0 %v87
    %121 = vmatprep.subr.mxu0 0.0
    %122 = vmatpush1.msra.mxu0 0.0
    %123 = vmatprep.subr.mxu0 0.0
    %124 = vmatpush1.msra.mxu0 0.0
    %125 = vmatprep.subr.mxu0 0.0
    %126 = vmatpush1.msra.mxu0 0.0
    %127 = vmatprep.subr.mxu0 0.0
    %128 = vmatpush1.msra.mxu0 0.0
    %129 = vmatprep.subr.mxu0 0.0
    %130 = vmatpush1.msra.mxu0 0.0
    %131 = vmatprep.subr.mxu0 0.0
    %132 = vmatpush1.msra.mxu0 0.0
    %133 = vmatprep.subr.mxu0 0.0
    %134 = vmatpush1.msra.mxu0 0.0
    %135 = vmatprep.subr.mxu0 0.0
    %136 = vmatpush1.msra.mxu0 0.0
    %137 = vmatprep.subr.mxu0 0.0
    %138 = vmatpush1.msra.mxu0 0.0
    %139 = vmatprep.subr.mxu0 0.0
    %140 = vmatpush1.msra.mxu0 0.0
    %141 = vmatprep.subr.mxu0 0.0
    %142 = vmatpush1.msra.mxu0 0.0
    %143 = vmatprep.subr.mxu0 0.0
    %144 = vmatpush1.msra.mxu0 0.0
    %145 = vmatprep.subr.mxu0 0.0
    %146 = vmatpush1.msra.mxu0 0.0
    %147 = vmatprep.subr.mxu0 0.0
    %148 = vmatpush1.msra.mxu0 0.0
    %149 = vmatprep.subr.mxu0 0.0
    %150 = vmatpush1.msra.mxu0 0.0
    %151 = vmatprep.subr.mxu0 0.0
    %152 = vmatpush1.msra.mxu0 0.0
    %153 = vmatprep.mubr.f32.mxu0 0.0
    %154 = vmatmul.mubr.f32.gmra.mrb[0].mxu0 %v55
    %v155 = vpop.f32.mrb[0].mxu0
    %v156 = vadd.f32 0.0, %v155
    %v157 = vpop.f32.mrb[0].mxu0
    %v158 = vadd.f32 0.0, %v157
    %159 = vmatprep.mubr.f32.mxu0 0.0
    %160 = vmatmul.mubr.f32.gmra.mrb[0].mxu0 %v56
    %v161 = vpop.f32.mrb[0].mxu0
    %v162 = vadd.f32 0.0, %v161
    %v163 = vpop.f32.mrb[0].mxu0
    %v164 = vadd.f32 0.0, %v163
    %165 = vdwg.mxu0
    %v166 = vadd.f32 %v51, %v156
    %v167 = vadd.f32 %v52, %v158
    %v168 = vadd.f32 %v53, %v162
    %v169 = vadd.f32 %v54, %v164
    %170 = vst [vmem:[#allocation7] sm:$0xff] %v166
    %171 = vst [vmem:[#allocation7 + $0x8] sm:$0xff] %v167
    %172 = vst [vmem:[#allocation7 + $0x10] sm:$0xff] %v168
    %173 = vst [vmem:[#allocation7 + $0x18] sm:$0xff] %v169
    // Predicated region
    $region26: #{tpu_custom_call.1} parent=1 // pred_check
      %p174 = pneg %p43
    $region27: #{tpu_custom_call.1} parent=1 // pred_check_branch
      %176 = sbr.rel (%p174) target = $region29
    $region28: #{tpu_custom_call.1} parent=1 // pred_region
      %v177 = vld [vmem:[#allocation7] sm:$0xff]
      %v178 = vld [vmem:[#allocation7 + $0x8] sm:$0xff]
      %v179 = vld [vmem:[#allocation7 + $0x10] sm:$0xff]
      %v180 = vld [vmem:[#allocation7 + $0x18] sm:$0xff]
      %v181 = vld [vmem:[%s2] sm:$0x3]
      %v183 = vlaneseq
      %v184 = vshrl.u32 %v183, 7
      %v185 = vsub.s32 0, %v184
      %v186 = vrot.slane %v181, %v185
      %v187 = vlaneseq
      %v188 = vshrl.u32 %v187, 7
      %v189 = vsub.s32 1, %v188
      %v190 = vrot.slane %v181, %v189
      %v193 = vadd.f32 %v177, %v186
      %v194 = vadd.f32 %v178, %v190
      %v195 = vadd.f32 %v179, %v186
      %v196 = vadd.f32 %v180, %v190
      %197 = vst [vmem:[#allocation7] sm:$0xff] %v193
      %198 = vst [vmem:[#allocation7 + $0x8] sm:$0xff] %v194
      %199 = vst [vmem:[#allocation7 + $0x10] sm:$0xff] %v195
      %200 = vst [vmem:[#allocation7 + $0x18] sm:$0xff] %v196
    $region29: #{tpu_custom_call.1} parent=1 // pred_fallthru
      _
    // Predicated region
    $region30: #{tpu_custom_call.1} parent=1 // pred_check
      _
    $region31: #{tpu_custom_call.1} parent=1 // pred_check_branch
      %202 = sbr.rel (0) target = $region33
    $region32: #{tpu_custom_call.1} parent=1 // pred_region
      %s204 = ssub.s32 512, 512
      %205 = vsyncadd [#allocation4], %s204
      %s206 = sshll.u32 [#allocation7], 4
      %s207 = int_to_ptr.vmem [resolvable:$true] %s206
      %212 = dma.vmem_to_hbm [thread:$0]  %s207, 512, %s3, [#allocation4], 256, 256, 16
    $region33: #{tpu_custom_call.1} parent=1 // pred_fallthru
      _
    // Predicated region
    $region34: #{tpu_custom_call.1} parent=1 // pred_check
      _
    $region35: #{tpu_custom_call.1} parent=1 // pred_check_branch
      %214 = sbr.rel (0) target = $region37
    $region36: #{tpu_custom_call.1} parent=1 // pred_region
      %215 = dma.done [#allocation4], 512
    $region37: #{tpu_custom_call.1} parent=1 // pred_fallthru
      _
    %216 = vsyncpa [#allocation3], 1
    %217 = vsyncpa [#allocation6], 1
    %218 = vsyncpa [#allocation4], 1

</llo_original>
